<compile_context>
chip_gen: v7x
topology: tpu7x:2x2x1
jax: 0.10.0
libtpu: 0.0.40
codegen_flags: <defaults>
</compile_context>

<pallas_src>
import jax
import jax.numpy as jnp
from jax.experimental import pallas as pl
from jax.experimental.pallas import tpu as pltpu


def _neg_kernel(x_ref, o_ref):
    # Elementwise negation on the current VMEM tile (VPU op; DMA-bound kernel).
    o_ref[...] = -x_ref[...]


_LANES = 128                                   # lane-dense last dim -> unmasked vst
_TARGET_TILE_BYTES = 8 * 1024 * 1024           # ~8 MiB per input tile per grid step
_VMEM_LIMIT_BYTES = 40 * 1024 * 1024           # 2 bufs * (in+out) * 8 MiB = 32 MiB + headroom
_SINGLE_BLOCK_MAX_BYTES = 512 * 1024           # below this, one block (step overhead dominates)
_RAGGED_SINGLE_BLOCK_MAX_BYTES = 8 * 1024 * 1024
_MIN_SPLIT_STEPS = 4                           # >=4 steps -> DMA overlap + v7x dual-TC sharding


def _round_up(v: int, m: int) -> int:
    return ((v + m - 1) // m) * m


def neg_pallas(x: jax.Array, *, donate: bool = False) -> jax.Array:
    """Elementwise negation via a Pallas TPU kernel (float / int dtypes).

    donate=True adds input_output_aliases={0: 0}; only useful if the caller also donates
    x at the jit boundary (avoids a second full-size HBM allocation).
    """
    if x.dtype == jnp.bool_:
        # PyTorch raises for -bool; mirror that rather than silently flipping bits.
        raise TypeError("negation is not defined for bool tensors")

    orig_shape = x.shape
    dtype = x.dtype
    n = x.size
    if n == 0:
        return x

    itemsize = jnp.dtype(dtype).itemsize
    # Sublane packing: 8 rows/vreg for 32-bit, 16 for 16-bit, 32 for 8-bit dtypes.
    sub = 8 * max(1, 4 // itemsize)
    io_alias = {0: 0} if donate else {}

    if n % _LANES == 0:
        # ---- Fast path: lane-dense (rows, 128) streaming, no pad, no extra copies. ----
        rows = n // _LANES
        x2d = jnp.reshape(x, (rows, _LANES))   # row-major flatten: effectively free
        total_bytes = n * itemsize

        if total_bytes <= _SINGLE_BLOCK_MAX_BYTES:
            # Tiny array: one full-extent block; pipelining would be pure overhead.
            tile_rows = rows
        else:
            # Target ~8 MiB tiles, but split into at least _MIN_SPLIT_STEPS tiles so the
            # input DMA of tile i+1 overlaps the output DMA of tile i.
            target_rows = max(sub, (_TARGET_TILE_BYTES // (_LANES * itemsize)) // sub * sub)
            cap_rows = max(sub, _round_up(pl.cdiv(rows, _MIN_SPLIT_STEPS), sub))
            tile_rows = min(target_rows, cap_rows)
            grid_n = pl.cdiv(rows, tile_rows)
            if grid_n > 2 and grid_n % 2 == 1:
                # Best-effort: an even step count shards cleanly across v7x's two TCs
                # under dimension_semantics=("parallel",). No-op on v5e/v6e.
                alt = max(sub, _round_up(pl.cdiv(rows, grid_n + 1), sub))
                if pl.cdiv(rows, alt) % 2 == 0:
                    tile_rows = alt

        grid = (pl.cdiv(rows, tile_rows),)     # partial last block is masked by Pallas
        out2d = pl.pallas_call(
            _neg_kernel,
            out_shape=jax.ShapeDtypeStruct((rows, _LANES), dtype),
            grid_spec=pltpu.PrefetchScalarGridSpec(
                num_scalar_prefetch=0,
                grid=grid,
                in_specs=[pl.BlockSpec((tile_rows, _LANES), lambda i: (i, 0))],
                out_specs=pl.BlockSpec((tile_rows, _LANES), lambda i: (i, 0)),
            ),
            input_output_aliases=io_alias,
            compiler_params=pltpu.CompilerParams(
                dimension_semantics=("parallel",),   # megacore / v7x dual-TC sharding
                vmem_limit_bytes=_VMEM_LIMIT_BYTES,
            ),
        )(x2d)
        return jnp.reshape(out2d, orig_shape)

    # ---- Ragged path (n % 128 != 0) ----
    x_flat = jnp.reshape(x, (n,))
    if n * itemsize <= _RAGGED_SINGLE_BLOCK_MAX_BYTES:
        # Single full-extent 1-D block: no pad, no output slice, zero extra HBM traffic.
        out_flat = pl.pallas_call(
            _neg_kernel,
            out_shape=jax.ShapeDtypeStruct((n,), dtype),
            grid_spec=pltpu.PrefetchScalarGridSpec(
                num_scalar_prefetch=0,
                grid=(1,),
                in_specs=[pl.BlockSpec((n,), lambda i: (0,))],
                out_specs=pl.BlockSpec((n,), lambda i: (0,)),
            ),
            input_output_aliases=io_alias,
            compiler_params=pltpu.CompilerParams(
                dimension_semantics=("arbitrary",),
                vmem_limit_bytes=_VMEM_LIMIT_BYTES,
            ),
        )(x_flat)
        return jnp.reshape(out_flat, orig_shape)

    # Huge AND ragged (rare): pad to the next 128 multiple and reuse the fast path.
    # TODO(synk): handle the <128-element tail in-kernel (memory_space=pl.ANY +
    # pltpu.make_async_copy with a pl.ds-sized final chunk) to avoid the pad/slice copies.
    pad = (-n) % _LANES
    out_pad = neg_pallas(jnp.pad(x_flat, (0, pad)))
    return jnp.reshape(out_pad[:n], orig_shape)


if __name__ == "__main__":
    key = jax.random.PRNGKey(0)

    # Small NCHW input consistent with the test module (single-block fast path).
    x = jax.random.normal(key, (2, 4, 16, 16), dtype=jnp.float32)
    y = neg_pallas(x)
    jax.block_until_ready(y)
    assert y.shape == x.shape and y.dtype == x.dtype
    assert jnp.allclose(y, -x), "mismatch vs reference negation (f32 small)"

    # Medium divisible input: exercises the multi-tile pipelined/parallel path (grid >= 4).
    x_med = jax.random.normal(jax.random.PRNGKey(2), (4, 64, 32, 32), dtype=jnp.float32)
    y_med = neg_pallas(x_med)
    jax.block_until_ready(y_med)
    assert jnp.array_equal(y_med, -x_med), "mismatch vs reference negation (f32 tiled)"

    # Ragged + narrow dtype: exercises the single full-extent 1-D block path (no pad).
    x_rag = jax.random.normal(jax.random.PRNGKey(1), (3, 5, 7), dtype=jnp.bfloat16)
    y_rag = neg_pallas(x_rag)
    jax.block_until_ready(y_rag)
    assert y_rag.shape == x_rag.shape and y_rag.dtype == x_rag.dtype
    assert jnp.array_equal(y_rag, -x_rag), "mismatch vs reference negation (bf16 ragged)"

    print("KERNEL_OK")
</pallas_src>

<mosaic_0001>
module attributes {stable_mosaic.version = 11 : i64} {
  func.func @_neg_kernel(%arg0: i32, %arg1: memref<16x128xf32, #tpu.memory_space<vmem>>, %arg2: memref<16x128xf32, #tpu.memory_space<vmem>>) attributes {dimension_semantics = [#tpu.dimension_semantics<parallel>], iteration_bounds = array<i64: 1>, scalar_prefetch = 0 : i64, scratch_operands = 0 : i64, tpu.core_type = #tpu.core_type<tc>, window_params = [{transform_indices = @transform_0, window_bounds = array<i64: 16, 128>}, {transform_indices = @transform_1, window_bounds = array<i64: 16, 128>}]} {
    %c0 = arith.constant 0 : index
    %c0_0 = arith.constant 0 : index
    %0 = vector.load %arg1[%c0, %c0_0] : memref<16x128xf32, #tpu.memory_space<vmem>>, vector<16x128xf32>
    %cst = arith.constant 0.000000e+00 : f32
    %1 = vector.broadcast %cst : f32 to vector<16x128xf32>
    %2 = arith.subf %1, %0 : vector<16x128xf32>
    %c0_1 = arith.constant 0 : index
    %c0_2 = arith.constant 0 : index
    %3 = vector.load %arg2[%c0_1, %c0_2] : memref<16x128xf32, #tpu.memory_space<vmem>>, vector<16x128xf32>
    tpu.vector_store %arg2[%c0_1, %c0_2], %2 {strides = array<i32>} : memref<16x128xf32, #tpu.memory_space<vmem>>, vector<16x128xf32>,
    return
  }
  func.func @transform_0(%arg0: i32) -> (i32, i32) {
    %c0_i32 = arith.constant 0 : i32
    %c0_i32_0 = arith.constant 0 : i32
    return %arg0, %c0_i32 : i32, i32
  }
  func.func @transform_1(%arg0: i32) -> (i32, i32) {
    %c0_i32 = arith.constant 0 : i32
    %c0_i32_0 = arith.constant 0 : i32
    return %arg0, %c0_i32 : i32, i32
  }
}

</mosaic_0001>

<llo_original>
// kernel: tpu_custom_call.1
$region0: #{tpu_custom_call.1}
  #allocation0 [shape = 'u32[]', space=smem, size = 0x4, offset = 0x4, fixed_abs, tag = 'smem constant byte address 0x4 - core index']
  #allocation1 [shape = 'u32[144,128]{1,0:T(1,128)}', space=vmem, size = 0x12000, scoped, tag = 'internal scratch']
  %s0 = inlined_call_operand.hbm [shape: f32[16,128], index: 0, kind: input, shape index: {}]
  %s1 = inlined_call_operand.hbm [shape: f32[16,128], index: 1, kind: output, shape index: {}]
  %s2 = sld [smem:[#allocation0]]
  $region18: #{tpu_custom_call.1} parent=0
    _
  %s4 = ssub.s32 1, %s2
  %s5 = scalar_select 0, %s4, %s2
  $region1: #{tpu_custom_call.1} parent=0
    #allocation2 [shape = 'u8[8192]{0}', space=vmem, size = 0x2000, scoped, tag = 'input window, operand 0, single buffered']
    #allocation3 [shape = 's32[1]{0}', space=sflag, size = 0x4, scoped, tag = 'scoped memory for tpu_custom_call.1']
    #allocation4 [shape = 's32[1]{0}', space=sflag, size = 0x4, scoped, tag = 'scoped memory for tpu_custom_call.1']
    #allocation5 [shape = 'u8[8192]{0}', space=vmem, size = 0x2000, scoped, tag = 'output window, operand 0, single buffered']
    %6 = vsyncpa [#allocation3], 0
    %7 = vsyncpa [#allocation4], 0
    // Predicated region
    $region2: #{tpu_custom_call.1} parent=1 // pred_check
      _
    $region3: #{tpu_custom_call.1} parent=1 // pred_check_branch
      %9 = sbr.rel (0) target = $region5
    $region4: #{tpu_custom_call.1} parent=1 // pred_region
      %s11 = ssub.s32 256, 256
      %12 = vsyncadd [#allocation3], %s11
      %s13 = sshll.u32 [#allocation2], 4
      %s14 = int_to_ptr.vmem [resolvable:$true] %s13
      %19 = dma.hbm_to_vmem [thread:$0]  %s0, 256, %s14, [#allocation3], 128, 128, 8
    $region5: #{tpu_custom_call.1} parent=1 // pred_fallthru
      _
    // Predicated region
    $region6: #{tpu_custom_call.1} parent=1 // pred_check
      _
    $region7: #{tpu_custom_call.1} parent=1 // pred_check_branch
      %21 = sbr.rel (0) target = $region9
    $region8: #{tpu_custom_call.1} parent=1 // pred_region
      %22 = dma.done [#allocation3], 256
    $region9: #{tpu_custom_call.1} parent=1 // pred_fallthru
      _
    %v23 = vld [vmem:[#allocation2] sm:$0xff]
    %v24 = vld [vmem:[#allocation2 + $0x8] sm:$0xff]
    %v25 = vsub.f32 0.0, %v23
    %v26 = vsub.f32 0.0, %v24
    %27 = vst [vmem:[#allocation5] sm:$0xff] %v25
    %28 = vst [vmem:[#allocation5 + $0x8] sm:$0xff] %v26
    // Predicated region
    $region10: #{tpu_custom_call.1} parent=1 // pred_check
      _
    $region11: #{tpu_custom_call.1} parent=1 // pred_check_branch
      %30 = sbr.rel (0) target = $region13
    $region12: #{tpu_custom_call.1} parent=1 // pred_region
      %s32 = ssub.s32 256, 256
      %33 = vsyncadd [#allocation4], %s32
      %s34 = sshll.u32 [#allocation5], 4
      %s35 = int_to_ptr.vmem [resolvable:$true] %s34
      %40 = dma.vmem_to_hbm [thread:$0]  %s35, 256, %s1, [#allocation4], 128, 128, 8
    $region13: #{tpu_custom_call.1} parent=1 // pred_fallthru
      _
    // Predicated region
    $region14: #{tpu_custom_call.1} parent=1 // pred_check
      _
    $region15: #{tpu_custom_call.1} parent=1 // pred_check_branch
      %42 = sbr.rel (0) target = $region17
    $region16: #{tpu_custom_call.1} parent=1 // pred_region
      %43 = dma.done [#allocation4], 256
    $region17: #{tpu_custom_call.1} parent=1 // pred_fallthru
      _
    %44 = vsyncpa [#allocation3], 1
    %45 = vsyncpa [#allocation4], 1

</llo_original>
